<compile_context>
chip_gen: v7x
topology: tpu7x:2x2x1
jax: 0.10.0
libtpu: 0.0.40
codegen_flags: <defaults>
</compile_context>

<pallas_src>
import functools
import math

import jax
import jax.numpy as jnp
from jax import lax
from jax.experimental import pallas as pl
from jax.experimental.pallas import tpu as pltpu


# Vocabulary sizes from the PyTorch module.
MINUTE_SIZE = 4
HOUR_SIZE = 24
WEEKDAY_SIZE = 7
DAY_SIZE = 32
MONTH_SIZE = 13

LANE = 128
SUBLANE = 8


# ----------------------------------------------------------------------------
# Static feature layout (compile-time constants per `freq`)
# ----------------------------------------------------------------------------
def _feature_layout(freq):
    """Returns (feat_specs, sizes, total, k_pad).

    feat_specs: tuple of (input_feature_column, offset_into_combined_table) in
    the forward() order: x[...,3]=hour, x[...,2]=weekday, x[...,1]=day,
    x[...,0]=month, and x[...,4]=minute if freq=='t'.
    """
    feats = [(3, HOUR_SIZE), (2, WEEKDAY_SIZE), (1, DAY_SIZE), (0, MONTH_SIZE)]
    if freq == 't':
        feats.append((4, MINUTE_SIZE))
    specs, sizes, off = [], [], 0
    for col, size in feats:
        specs.append((col, off))
        sizes.append(size)
        off += size
    k_pad = ((off + LANE - 1) // LANE) * LANE                        # -> 128
    return tuple(specs), tuple(sizes), off, k_pad


# ----------------------------------------------------------------------------
# FixedEmbedding weight construction (identical to the PyTorch init)
# ----------------------------------------------------------------------------
def _fixed_embedding_table(c_in, d_model):
    position = jnp.arange(c_in, dtype=jnp.float32)[:, None]          # [c_in, 1]
    div_term = jnp.exp(
        jnp.arange(0, d_model, 2, dtype=jnp.float32)
        * -(math.log(10000.0) / d_model))                            # [d_model//2]
    ang = position * div_term                                        # [c_in, d_model//2]
    w = jnp.zeros((c_in, d_model), jnp.float32)
    w = w.at[:, 0::2].set(jnp.sin(ang))
    w = w.at[:, 1::2].set(jnp.cos(ang))
    return w


def build_temporal_table(d_model, freq='h'):
    """Combined (unpadded) table [sum(vocab_sizes), d_model] f32."""
    _, sizes, _, _ = _feature_layout(freq)
    tabs = [_fixed_embedding_table(s, d_model) for s in sizes]
    return jnp.concatenate(tabs, axis=0)


# ----------------------------------------------------------------------------
# Pallas kernel: fused multi-embedding gather + sum as one multi-hot matmul
# ----------------------------------------------------------------------------
def temporal_embed_kernel(x_ref, table_ref, o_ref, *, feat_specs):
    # x_ref:     [tile_n, F]       int32  raw time-feature marks
    # table_ref: [k_pad, d_pad]    f32    combined zero-padded embedding table
    # o_ref:     [tile_n, d_pad]   f32    sum of the per-feature embeddings
    tile_n = x_ref.shape[0]
    k_pad = table_ref.shape[0]
    idx = x_ref[...]                                                 # [tile_n, F]
    cols = lax.broadcasted_iota(jnp.int32, (tile_n, k_pad), 1)

    # Boolean multi-hot (feature ranges in the combined table are disjoint),
    # then one cast. The gather + sum of all lookups collapses into a single
    # MXU matmul with lane-dense, unmasked output stores.
    hot = None
    for col, off in feat_specs:                                      # static, tiny
        m = cols == (idx[:, col:col + 1] + off)
        hot = m if hot is None else (hot | m)
    hot_f = hot.astype(jnp.float32)

    o_ref[...] = jnp.dot(hot_f, table_ref[...],
                         preferred_element_type=jnp.float32)


def temporal_embedding(x, table, *, freq='h', tile_n=1024):
    """TemporalEmbedding.forward: x [B, T, F] integer marks -> [B, T, d_model]."""
    B, T, F = x.shape
    feat_specs, _, total, k_pad = _feature_layout(freq)
    total_rows, d_model = table.shape
    assert total_rows == total, "table rows must match freq's vocab layout"

    # Lane-dense output: pad d_model up to a multiple of 128 (unmasked vst).
    d_pad = ((d_model + LANE - 1) // LANE) * LANE
    table_p = jnp.pad(table, ((0, k_pad - total), (0, d_pad - d_model)))

    n = B * T
    idx = x.reshape(n, F).astype(jnp.int32)                          # x.long()

    # Row tile: as large as reasonable (amortizes ~0.35us/grid-step overhead),
    # sublane-aligned, clamped to the problem size.
    tn = min(tile_n, ((n + SUBLANE - 1) // SUBLANE) * SUBLANE)
    tn = max(SUBLANE, (tn // SUBLANE) * SUBLANE)
    n_pad = ((n + tn - 1) // tn) * tn
    if n_pad != n:
        idx = jnp.pad(idx, ((0, n_pad - n), (0, 0)))                 # pad rows hit index 0;
                                                                     # garbage rows sliced off below

    # Explicit VMEM budget (double-buffered I/O + in-kernel temporaries),
    # re-derived so large tiles stay within v7x's 64 MiB physical VMEM.
    out_bytes = 2 * tn * d_pad * 4                                   # output double-buffer
    idx_bytes = 2 * tn * LANE * 4                                    # int32 block pads to 128 lanes
    tab_bytes = 2 * k_pad * d_pad * 4                                # table buffers (constant block)
    tmp_bytes = 2 * tn * k_pad * 4                                   # iota + multi-hot temporaries
    vmem_limit = int(min(max(2 * (out_bytes + idx_bytes + tab_bytes + tmp_bytes),
                             16 << 20), 64 << 20))

    out = pl.pallas_call(
        functools.partial(temporal_embed_kernel, feat_specs=feat_specs),
        out_shape=jax.ShapeDtypeStruct((n_pad, d_pad), jnp.float32),
        grid_spec=pltpu.PrefetchScalarGridSpec(
            num_scalar_prefetch=0,
            grid=(n_pad // tn,),
            in_specs=[
                pl.BlockSpec((tn, F), lambda i: (i, 0)),
                pl.BlockSpec((k_pad, d_pad), lambda i: (0, 0)),      # constant block, not re-DMA'd
            ],
            out_specs=pl.BlockSpec((tn, d_pad), lambda i: (i, 0)),
        ),
        compiler_params=pltpu.CompilerParams(
            dimension_semantics=("parallel",),                       # v7x: swap to CORE_PARALLEL for 2-TC sharding
            vmem_limit_bytes=vmem_limit),
    )(idx, table_p)
    return out[:n, :d_model].reshape(B, T, d_model)


# ----------------------------------------------------------------------------
# Pure-JAX reference (matches the PyTorch forward)
# ----------------------------------------------------------------------------
def temporal_embedding_ref(x, table, *, freq='h'):
    feat_specs, _, _, _ = _feature_layout(freq)
    x = x.astype(jnp.int32)
    out = 0.0
    for col, off in feat_specs:
        out = out + jnp.take(table, x[:, :, col] + off, axis=0)
    return out


def _random_marks(key, B, T):
    k_mo, k_d, k_wd, k_h, k_mi = jax.random.split(key, 5)
    month = jax.random.randint(k_mo, (B, T), 0, MONTH_SIZE)
    day = jax.random.randint(k_d, (B, T), 0, DAY_SIZE)
    weekday = jax.random.randint(k_wd, (B, T), 0, WEEKDAY_SIZE)
    hour = jax.random.randint(k_h, (B, T), 0, HOUR_SIZE)
    minute = jax.random.randint(k_mi, (B, T), 0, MINUTE_SIZE)
    # x[..., 0]=month, 1=day, 2=weekday, 3=hour, 4=minute (module convention)
    return jnp.stack([month, day, weekday, hour, minute], axis=-1).astype(jnp.int32)


if __name__ == "__main__":
    key = jax.random.PRNGKey(0)
    B, T, d_model = 2, 8, 128
    x = _random_marks(key, B, T)

    # freq='h' (default): hour + weekday + day + month (minute term is 0.0)
    table_h = build_temporal_table(d_model, freq='h')
    fwd_h = jax.jit(functools.partial(temporal_embedding, freq='h'))
    out_h = jax.block_until_ready(fwd_h(x, table_h))
    ref_h = temporal_embedding_ref(x, table_h, freq='h')
    assert out_h.shape == (B, T, d_model), out_h.shape
    assert out_h.dtype == jnp.float32
    assert jnp.allclose(out_h, ref_h, atol=1e-5, rtol=1e-5)

    # freq='t': additionally adds the minute embedding
    table_t = build_temporal_table(d_model, freq='t')
    fwd_t = jax.jit(functools.partial(temporal_embedding, freq='t'))
    out_t = jax.block_until_ready(fwd_t(x, table_t))
    ref_t = temporal_embedding_ref(x, table_t, freq='t')
    assert out_t.shape == (B, T, d_model), out_t.shape
    assert jnp.allclose(out_t, ref_t, atol=1e-5, rtol=1e-5)

    # Multi-tile grid + row-padding path (n not a multiple of the tile).
    x_big = _random_marks(jax.random.PRNGKey(1), 4, 600)             # n = 2400 -> grid of 3, pad 672 rows
    out_big = jax.block_until_ready(fwd_t(x_big, table_t))
    ref_big = temporal_embedding_ref(x_big, table_t, freq='t')
    assert out_big.shape == (4, 600, d_model)
    assert jnp.allclose(out_big, ref_big, atol=1e-5, rtol=1e-5)

    print("KERNEL_OK")
</pallas_src>

<mosaic_0001>
module attributes {stable_mosaic.version = 11 : i64} {
  func.func @temporal_embed_kernel(%arg0: i32, %arg1: memref<16x5xi32, #tpu.memory_space<vmem>>, %arg2: memref<128x128xf32, #tpu.memory_space<vmem>>, %arg3: memref<16x128xf32, #tpu.memory_space<vmem>>) attributes {dimension_semantics = [#tpu.dimension_semantics<parallel>], iteration_bounds = array<i64: 1>, scalar_prefetch = 0 : i64, scratch_operands = 0 : i64, tpu.core_type = #tpu.core_type<tc>, window_params = [{transform_indices = @transform_0, window_bounds = array<i64: 16, 5>}, {pipeline_mode = #tpu.pipeline_mode<synchronous>, transform_indices = @transform_1, window_bounds = array<i64: 128, 128>}, {transform_indices = @transform_2, window_bounds = array<i64: 16, 128>}]} {
    %c0 = arith.constant 0 : index
    %c0_0 = arith.constant 0 : index
    %0 = vector.load %arg1[%c0, %c0_0] : memref<16x5xi32, #tpu.memory_space<vmem>>, vector<16x5xi32>
    %1 = tpu.iota {dimensions = array<i32: 1>} : vector<16x128xi32>
    %2 = vector.extract_strided_slice %0 {offsets = [0, 3], sizes = [16, 1], strides = [1, 1]} : vector<16x5xi32> to vector<16x1xi32>
    %c0_i32 = arith.constant 0 : i32
    %3 = vector.broadcast %c0_i32 : i32 to vector<16x1xi32>
    %4 = arith.addi %2, %3 : vector<16x1xi32>
    %5 = vector.broadcast %4 : vector<16x1xi32> to vector<16x128xi32>
    %6 = arith.cmpi eq, %1, %5 : vector<16x128xi32>
    %7 = vector.extract_strided_slice %0 {offsets = [0, 2], sizes = [16, 1], strides = [1, 1]} : vector<16x5xi32> to vector<16x1xi32>
    %c24_i32 = arith.constant 24 : i32
    %8 = vector.broadcast %c24_i32 : i32 to vector<16x1xi32>
    %9 = arith.addi %7, %8 : vector<16x1xi32>
    %10 = vector.broadcast %9 : vector<16x1xi32> to vector<16x128xi32>
    %11 = arith.cmpi eq, %1, %10 : vector<16x128xi32>
    %12 = arith.ori %6, %11 : vector<16x128xi1>
    %13 = vector.extract_strided_slice %0 {offsets = [0, 1], sizes = [16, 1], strides = [1, 1]} : vector<16x5xi32> to vector<16x1xi32>
    %c31_i32 = arith.constant 31 : i32
    %14 = vector.broadcast %c31_i32 : i32 to vector<16x1xi32>
    %15 = arith.addi %13, %14 : vector<16x1xi32>
    %16 = vector.broadcast %15 : vector<16x1xi32> to vector<16x128xi32>
    %17 = arith.cmpi eq, %1, %16 : vector<16x128xi32>
    %18 = arith.ori %12, %17 : vector<16x128xi1>
    %19 = vector.extract_strided_slice %0 {offsets = [0, 0], sizes = [16, 1], strides = [1, 1]} : vector<16x5xi32> to vector<16x1xi32>
    %c63_i32 = arith.constant 63 : i32
    %20 = vector.broadcast %c63_i32 : i32 to vector<16x1xi32>
    %21 = arith.addi %19, %20 : vector<16x1xi32>
    %22 = vector.broadcast %21 : vector<16x1xi32> to vector<16x128xi32>
    %23 = arith.cmpi eq, %1, %22 : vector<16x128xi32>
    %24 = arith.ori %18, %23 : vector<16x128xi1>
    %25 = arith.extui %24 : vector<16x128xi1> to vector<16x128xi32>
    %26 = arith.sitofp %25 : vector<16x128xi32> to vector<16x128xf32>
    %c0_1 = arith.constant 0 : index
    %c0_2 = arith.constant 0 : index
    %27 = vector.load %arg2[%c0_1, %c0_2] : memref<128x128xf32, #tpu.memory_space<vmem>>, vector<128x128xf32>
    %cst = arith.constant dense<0.000000e+00> : vector<16x128xf32>
    %28 = tpu.matmul %26, %27, %cst {dimension_numbers = #tpu.dot_dimension_numbers<[1], [0], [0], [1], [0, 0, 1, 1], [], []>} : vector<16x128xf32>, vector<128x128xf32>, vector<16x128xf32> -> vector<16x128xf32>
    %c0_3 = arith.constant 0 : index
    %c0_4 = arith.constant 0 : index
    %29 = vector.load %arg3[%c0_3, %c0_4] : memref<16x128xf32, #tpu.memory_space<vmem>>, vector<16x128xf32>
    tpu.vector_store %arg3[%c0_3, %c0_4], %28 {strides = array<i32>} : memref<16x128xf32, #tpu.memory_space<vmem>>, vector<16x128xf32>,
    return
  }
  func.func @transform_0(%arg0: i32) -> (i32, i32) {
    %c0_i32 = arith.constant 0 : i32
    %c0_i32_0 = arith.constant 0 : i32
    return %arg0, %c0_i32 : i32, i32
  }
  func.func @transform_1(%arg0: i32) -> (i32, i32) {
    %c0_i32 = arith.constant 0 : i32
    %c0_i32_0 = arith.constant 0 : i32
    %c0_i32_1 = arith.constant 0 : i32
    return %c0_i32, %c0_i32_0 : i32, i32
  }
  func.func @transform_2(%arg0: i32) -> (i32, i32) {
    %c0_i32 = arith.constant 0 : i32
    %c0_i32_0 = arith.constant 0 : i32
    return %arg0, %c0_i32 : i32, i32
  }
}

</mosaic_0001>

<llo_original>
// kernel: temporal_embedding.1
$region0: #{temporal_embedding.1}
  #allocation0 [shape = 'u32[]', space=smem, size = 0x4, offset = 0x4, fixed_abs, tag = 'smem constant byte address 0x4 - core index']
  #allocation1 [shape = 'u32[144,128]{1,0:T(1,128)}', space=vmem, size = 0x12000, scoped, tag = 'internal scratch']
  %s0 = inlined_call_operand.vmem [shape: s32[16,5], index: 0, kind: input, shape index: {}]
  %s1 = inlined_call_operand.vmem [shape: f32[128,128], index: 1, kind: input, shape index: {}]
  %s2 = inlined_call_operand.hbm [shape: f32[16,128], index: 2, kind: output, shape index: {}]
  %s3 = sld [smem:[#allocation0]]
  $region18: #{temporal_embedding.1} parent=0
    _
  %s5 = ssub.s32 1, %s3
  %s6 = scalar_select 0, %s5, %s3
  $region1: #{temporal_embedding.1} parent=0
    #allocation2 [shape = 'u8[8192]{0}', space=vmem, size = 0x2000, scoped, tag = 'output window, operand 0, single buffered']
    #allocation3 [shape = 's32[1]{0}', space=sflag, size = 0x4, scoped, tag = 'scoped memory for temporal_embedding.1']
    %7 = vsyncpa [#allocation3], 0
    // Predicated region
    $region2: #{temporal_embedding.1} parent=1 // pred_check
      _
    $region3: #{temporal_embedding.1} parent=1 // pred_check_branch
      %9 = sbr.rel (0) target = $region5
    $region4: #{temporal_embedding.1} parent=1 // pred_region
      _
    $region5: #{temporal_embedding.1} parent=1 // pred_fallthru
      _
    // Predicated region
    $region6: #{temporal_embedding.1} parent=1 // pred_check
      _
    $region7: #{temporal_embedding.1} parent=1 // pred_check_branch
      %11 = sbr.rel (0) target = $region9
    $region8: #{temporal_embedding.1} parent=1 // pred_region
      _
    $region9: #{temporal_embedding.1} parent=1 // pred_fallthru
      _
    %v12 = vld [vmem:[%s0] sm:$0xff]
    %v13 = vld [vmem:[%s0 + $0x8] sm:$0xff]
    %v14 = vlaneseq
    %v15 = vand.u32 %v14, 127
    %16 = vset.pattern.permute.xlu0 3
    %17 = vperm.xlu0 %16, %v12
    %v18 = vpop.permute.xlu0 %17
    %19 = vset.pattern.permute.xlu0 3
    %20 = vperm.xlu0 %19, %v13
    %v21 = vpop.permute.xlu0 %20
    %vm22 = vcmp.eq.s32.totalorder %v15, %v18
    %vm23 = vcmp.eq.s32.totalorder %v15, %v21
    %v24 = vadd.s32 %v12, 24
    %v25 = vadd.s32 %v13, 24
    %26 = vset.pattern.permute.xlu0 2
    %27 = vperm.xlu0 %26, %v24
    %v28 = vpop.permute.xlu0 %27
    %29 = vset.pattern.permute.xlu0 2
    %30 = vperm.xlu0 %29, %v25
    %v31 = vpop.permute.xlu0 %30
    %vm32 = vcmp.eq.s32.totalorder %v15, %v28
    %vm33 = vcmp.eq.s32.totalorder %v15, %v31
    %vm34 = vmor %vm22, %vm32
    %vm35 = vmor %vm23, %vm33
    %v36 = vadd.s32 %v12, 31
    %v37 = vadd.s32 %v13, 31
    %38 = vset.pattern.permute.xlu0 1
    %39 = vperm.xlu0 %38, %v36
    %v40 = vpop.permute.xlu0 %39
    %41 = vset.pattern.permute.xlu0 1
    %42 = vperm.xlu0 %41, %v37
    %v43 = vpop.permute.xlu0 %42
    %vm44 = vcmp.eq.s32.totalorder %v15, %v40
    %vm45 = vcmp.eq.s32.totalorder %v15, %v43
    %vm46 = vmor %vm34, %vm44
    %vm47 = vmor %vm35, %vm45
    %v48 = vadd.s32 %v12, 63
    %v49 = vadd.s32 %v13, 63
    %50 = vset.pattern.permute.xlu0 0
    %51 = vperm.xlu0 %50, %v48
    %v52 = vpop.permute.xlu0 %51
    %53 = vset.pattern.permute.xlu0 0
    %54 = vperm.xlu0 %53, %v49
    %v55 = vpop.permute.xlu0 %54
    %vm56 = vcmp.eq.s32.totalorder %v15, %v52
    %vm57 = vcmp.eq.s32.totalorder %v15, %v55
    %vm58 = vmor %vm46, %vm56
    %vm59 = vmor %vm47, %vm57
    %v60 = vsel %vm58, 1, 0
    %v61 = vsel %vm59, 1, 0
    %v62 = vcvt.s32.f32 %v60
    %v63 = vcvt.s32.f32 %v61
    %v64 = vld [vmem:[%s1] sm:$0xff]
    %v65 = vld [vmem:[%s1 + $0x8] sm:$0xff]
    %v66 = vld [vmem:[%s1 + $0x10] sm:$0xff]
    %v67 = vld [vmem:[%s1 + $0x18] sm:$0xff]
    %v68 = vld [vmem:[%s1 + $0x20] sm:$0xff]
    %v69 = vld [vmem:[%s1 + $0x28] sm:$0xff]
    %v70 = vld [vmem:[%s1 + $0x30] sm:$0xff]
    %v71 = vld [vmem:[%s1 + $0x38] sm:$0xff]
    %v72 = vld [vmem:[%s1 + $0x40] sm:$0xff]
    %v73 = vld [vmem:[%s1 + $0x48] sm:$0xff]
    %v74 = vld [vmem:[%s1 + $0x50] sm:$0xff]
    %v75 = vld [vmem:[%s1 + $0x58] sm:$0xff]
    %v76 = vld [vmem:[%s1 + $0x60] sm:$0xff]
    %v77 = vld [vmem:[%s1 + $0x68] sm:$0xff]
    %v78 = vld [vmem:[%s1 + $0x70] sm:$0xff]
    %v79 = vld [vmem:[%s1 + $0x78] sm:$0xff]
    %80 = vmatprep.subr.mxu0 0.0
    %81 = vmatpush1.msra.mxu0 %v64
    %82 = vmatprep.subr.mxu0 0.0
    %83 = vmatpush1.msra.mxu0 %v65
    %84 = vmatprep.subr.mxu0 0.0
    %85 = vmatpush1.msra.mxu0 %v66
    %86 = vmatprep.subr.mxu0 0.0
    %87 = vmatpush1.msra.mxu0 %v67
    %88 = vmatprep.subr.mxu0 0.0
    %89 = vmatpush1.msra.mxu0 %v68
    %90 = vmatprep.subr.mxu0 0.0
    %91 = vmatpush1.msra.mxu0 %v69
    %92 = vmatprep.subr.mxu0 0.0
    %93 = vmatpush1.msra.mxu0 %v70
    %94 = vmatprep.subr.mxu0 0.0
    %95 = vmatpush1.msra.mxu0 %v71
    %96 = vmatprep.subr.mxu0 0.0
    %97 = vmatpush1.msra.mxu0 %v72
    %98 = vmatprep.subr.mxu0 0.0
    %99 = vmatpush1.msra.mxu0 %v73
    %100 = vmatprep.subr.mxu0 0.0
    %101 = vmatpush1.msra.mxu0 %v74
    %102 = vmatprep.subr.mxu0 0.0
    %103 = vmatpush1.msra.mxu0 %v75
    %104 = vmatprep.subr.mxu0 0.0
    %105 = vmatpush1.msra.mxu0 %v76
    %106 = vmatprep.subr.mxu0 0.0
    %107 = vmatpush1.msra.mxu0 %v77
    %108 = vmatprep.subr.mxu0 0.0
    %109 = vmatpush1.msra.mxu0 %v78
    %110 = vmatprep.subr.mxu0 0.0
    %111 = vmatpush1.msra.mxu0 %v79
    %112 = vmatprep.subr.mxu0 0.0
    %113 = vmatpush1.msra.mxu0 0.0
    %114 = vmatprep.subr.mxu0 0.0
    %115 = vmatpush1.msra.mxu0 0.0
    %116 = vmatprep.subr.mxu0 0.0
    %117 = vmatpush1.msra.mxu0 0.0
    %118 = vmatprep.subr.mxu0 0.0
    %119 = vmatpush1.msra.mxu0 0.0
    %120 = vmatprep.subr.mxu0 0.0
    %121 = vmatpush1.msra.mxu0 0.0
    %122 = vmatprep.subr.mxu0 0.0
    %123 = vmatpush1.msra.mxu0 0.0
    %124 = vmatprep.subr.mxu0 0.0
    %125 = vmatpush1.msra.mxu0 0.0
    %126 = vmatprep.subr.mxu0 0.0
    %127 = vmatpush1.msra.mxu0 0.0
    %128 = vmatprep.subr.mxu0 0.0
    %129 = vmatpush1.msra.mxu0 0.0
    %130 = vmatprep.subr.mxu0 0.0
    %131 = vmatpush1.msra.mxu0 0.0
    %132 = vmatprep.subr.mxu0 0.0
    %133 = vmatpush1.msra.mxu0 0.0
    %134 = vmatprep.subr.mxu0 0.0
    %135 = vmatpush1.msra.mxu0 0.0
    %136 = vmatprep.subr.mxu0 0.0
    %137 = vmatpush1.msra.mxu0 0.0
    %138 = vmatprep.subr.mxu0 0.0
    %139 = vmatpush1.msra.mxu0 0.0
    %140 = vmatprep.subr.mxu0 0.0
    %141 = vmatpush1.msra.mxu0 0.0
    %142 = vmatprep.subr.mxu0 0.0
    %143 = vmatpush1.msra.mxu0 0.0
    %144 = vmatprep.mubr.f32.mxu0 0.0
    %145 = vmatmul.mubr.f32.gmra.mrb[0].mxu0 %v62
    %v146 = vpop.f32.mrb[0].mxu0
    %v147 = vadd.f32 0.0, %v146
    %v148 = vpop.f32.mrb[0].mxu0
    %149 = vmatprep.mubr.f32.mxu0 0.0
    %150 = vmatmul.mubr.f32.gmra.mrb[0].mxu0 %v63
    %v151 = vpop.f32.mrb[0].mxu0
    %v152 = vadd.f32 0.0, %v151
    %v153 = vpop.f32.mrb[0].mxu0
    %154 = vdwg.mxu0
    %155 = vst [vmem:[#allocation2] sm:$0xff] %v147
    %156 = vst [vmem:[#allocation2 + $0x8] sm:$0xff] %v152
    // Predicated region
    $region10: #{temporal_embedding.1} parent=1 // pred_check
      _
    $region11: #{temporal_embedding.1} parent=1 // pred_check_branch
      %158 = sbr.rel (0) target = $region13
    $region12: #{temporal_embedding.1} parent=1 // pred_region
      %s160 = ssub.s32 256, 256
      %161 = vsyncadd [#allocation3], %s160
      %s162 = sshll.u32 [#allocation2], 4
      %s163 = int_to_ptr.vmem [resolvable:$true] %s162
      %168 = dma.vmem_to_hbm [thread:$0]  %s163, 256, %s2, [#allocation3], 128, 128, 8
    $region13: #{temporal_embedding.1} parent=1 // pred_fallthru
      _
    // Predicated region
    $region14: #{temporal_embedding.1} parent=1 // pred_check
      _
    $region15: #{temporal_embedding.1} parent=1 // pred_check_branch
      %170 = sbr.rel (0) target = $region17
    $region16: #{temporal_embedding.1} parent=1 // pred_region
      %171 = dma.done [#allocation3], 256
    $region17: #{temporal_embedding.1} parent=1 // pred_fallthru
      _
    %172 = vsyncpa [#allocation3], 1

</llo_original>
